<compile_context>
chip_gen: v5e
topology: v5e:2x2
jax: 0.10.0
libtpu: 0.0.40
codegen_flags: <defaults>
</compile_context>

<pallas_src>
import jax
import jax.numpy as jnp
from jax.experimental import pallas as pl
from jax.experimental.pallas import tpu as pltpu

HID = 50      # logical hidden width
HP = 56       # hidden width padded to whole (8,128) sublane tiles

# ---------------------------------------------------------------------------
# Parameter-slab layout (row offsets are multiples of 16 -> aligned for both
# f32 and packed bf16 sublane tiling; everything starts at lane 0).
# ---------------------------------------------------------------------------
R_WX2 = 0      # (HP, HP)    net_x2 weight (padded)
R_W1 = 64      # (2*HP, 4)   fused [net_y ; net_x1] weight
R_B1 = 176     # (2*HP, 1)   fused [net_y ; net_x1] bias
R_BX2 = 288    # (HP, 1)     net_x2 bias
R_WLY = 352    # (2, HP)     lin_y weight
R_WLX = 368    # (2, HP)     lin_x weight
R_BH = 384     # (2, 1)      lin_y bias + lin_x bias (pre-summed)
SLAB_ROWS = 400
SLAB_COLS = 64


def _round_up(x, m):
    return (x + m - 1) // m * m


def init_params(key, dtype=jnp.float32):
    """Weights in PyTorch nn.Linear (out_features, in_features) layout.
    net_* weights ~ N(0, 0.1), biases 0 (matches module init); lin_y / lin_x
    get small random init (the module leaves them at PyTorch default)."""
    ks = jax.random.split(key, 7)
    std = 0.1
    return {
        "wy1": std * jax.random.normal(ks[0], (HID, 4), dtype),
        "by1": jnp.zeros((HID,), dtype),
        "wx1": std * jax.random.normal(ks[1], (HID, 4), dtype),
        "bx1": jnp.zeros((HID,), dtype),
        "wx2": std * jax.random.normal(ks[2], (HID, HID), dtype),
        "bx2": jnp.zeros((HID,), dtype),
        "wly": std * jax.random.normal(ks[3], (2, HID), dtype),
        "bly": std * jax.random.normal(ks[4], (2,), dtype),
        "wlx": std * jax.random.normal(ks[5], (2, HID), dtype),
        "blx": std * jax.random.normal(ks[6], (2,), dtype),
    }


def pack_params(p, dtype=jnp.bfloat16):
    """Pack all weights/biases into one slab -> single kernel operand.

    Pad rows/cols are exactly zero; the kernel relies on that invariant to
    compute with the padded hidden width HP=56 yet match the 50-wide module.
    Built in f32, cast once at the end (so bf16 rounding happens once)."""
    f32 = jnp.float32
    slab = jnp.zeros((SLAB_ROWS, SLAB_COLS), f32)
    slab = slab.at[R_WX2:R_WX2 + HID, 0:HID].set(p["wx2"].astype(f32))
    # Fused first layer: rows [0:HP) -> net_y, rows [HP:2*HP) -> net_x1.
    slab = slab.at[R_W1:R_W1 + HID, 0:4].set(p["wy1"].astype(f32))
    slab = slab.at[R_W1 + HP:R_W1 + HP + HID, 0:4].set(p["wx1"].astype(f32))
    slab = slab.at[R_B1:R_B1 + HID, 0:1].set(p["by1"].astype(f32)[:, None])
    slab = slab.at[R_B1 + HP:R_B1 + HP + HID, 0:1].set(
        p["bx1"].astype(f32)[:, None])
    slab = slab.at[R_BX2:R_BX2 + HID, 0:1].set(p["bx2"].astype(f32)[:, None])
    slab = slab.at[R_WLY:R_WLY + 2, 0:HID].set(p["wly"].astype(f32))
    slab = slab.at[R_WLX:R_WLX + 2, 0:HID].set(p["wlx"].astype(f32))
    slab = slab.at[R_BH:R_BH + 2, 0:1].set(
        (p["bly"] + p["blx"]).astype(f32)[:, None])
    return slab.astype(dtype)


# ---------------------------------------------------------------------------
# Kernel
# ---------------------------------------------------------------------------
def _ode_kernel(y_ref, p_ref, out_ref):
    # y_ref: (2, bn) feature-major block; batch rides the 128-lane axis.
    wdt = p_ref.dtype                     # matmul-operand dtype (bf16 or f32)
    y = y_ref[...]                                               # (2, bn) f32
    ye = jnp.concatenate([y, y * y * y], axis=0).astype(wdt)     # (4, bn)
    # TODO(synk): on v6e/v7x also run tanh/residual in bf16 (bf16 EUP/VPU);
    # kept in f32 here so the same kernel stays correct/fast on v5e.

    # Static, aligned window views into the resident parameter slab.
    w1 = p_ref[R_W1:R_W1 + 2 * HP, 0:4]                          # (112, 4)
    b1 = p_ref[R_B1:R_B1 + 2 * HP, 0:1].astype(jnp.float32)      # (112, 1)
    wx2 = p_ref[R_WX2:R_WX2 + HP, 0:HP]                          # (56, 56)
    bx2 = p_ref[R_BX2:R_BX2 + HP, 0:1].astype(jnp.float32)       # (56, 1)
    wly = p_ref[R_WLY:R_WLY + 2, 0:HP]                           # (2, 56)
    wlx = p_ref[R_WLX:R_WLX + 2, 0:HP]                           # (2, 56)
    bh = p_ref[R_BH:R_BH + 2, 0:1].astype(jnp.float32)           # (2, 1)

    # Fused net_y / net_x1: one Linear(4, 112) + one bias/tanh pass.
    h1 = jnp.tanh(jnp.dot(w1, ye, preferred_element_type=jnp.float32) + b1)
    h_y = h1[0:HP]                                               # (56, bn)
    h_x1 = h1[HP:2 * HP]                                         # (56, bn)

    # Residual merge + net_x2 : Linear(50,50) + Tanh (padded to 56).
    x2_in = (h_y + h_x1).astype(wdt)
    h_x2 = jnp.tanh(
        jnp.dot(wx2, x2_in, preferred_element_type=jnp.float32) + bx2)

    # lin_x(h_x2) + lin_y(h_y); head biases pre-summed into bh.
    out = (jnp.dot(wlx, h_x2.astype(wdt), preferred_element_type=jnp.float32)
           + jnp.dot(wly, h_y.astype(wdt), preferred_element_type=jnp.float32)
           + bh)
    out_ref[...] = out.astype(out_ref.dtype)                     # (2, bn)


# ---------------------------------------------------------------------------
# Wrappers
# ---------------------------------------------------------------------------
def _choose_bn(batch, bn_max):
    """Largest lane block up to bn_max, but split into >= 2 grid steps when
    the batch allows it so both v7x TensorCores get work (harmless on
    single-TC v5e/v6e: ~0.35us extra per step)."""
    bp_min = _round_up(batch, 128)
    half = _round_up(max(1, -(-bp_min // 2)), 128)
    return max(128, min(bn_max, half))


def ode_func_layered_residual_fm(t, y_fm, slab, *, bn_max=4096):
    """Feature-major forward: y_fm is (2, B), returns (2, B) float32.
    Preferred entry point inside an ODE solver (no transpose round-trips)."""
    del t  # unused, matches the PyTorch module
    nf, batch = y_fm.shape
    assert nf == 2
    bn = _choose_bn(batch, bn_max)
    bp = _round_up(batch, bn)
    y_fm = y_fm.astype(jnp.float32)
    if bp != batch:
        y_fm = jnp.pad(y_fm, ((0, 0), (0, bp - batch)))

    flops = bp * (2 * (2 * HP) * 4 + 2 * HP * HP + 2 * (2 * HP) * 2)
    out = pl.pallas_call(
        _ode_kernel,
        out_shape=jax.ShapeDtypeStruct((2, bp), jnp.float32),
        grid=(bp // bn,),
        in_specs=[
            pl.BlockSpec((2, bn), lambda i: (0, i)),                   # state
            pl.BlockSpec((SLAB_ROWS, SLAB_COLS), lambda i: (0, 0)),    # params
        ],
        out_specs=pl.BlockSpec((2, bn), lambda i: (0, i)),
        compiler_params=pltpu.CompilerParams(
            dimension_semantics=("parallel",)),
        # TODO(synk): on v7x, if "parallel" does not shard the grid across the
        # two TensorCores, switch to dimension_semantics=(pltpu.CORE_PARALLEL,).
        cost_estimate=pl.CostEstimate(
            flops=flops,
            transcendentals=bp * 3 * HP,
            bytes_accessed=(2 * 2 * bp * 4
                            + SLAB_ROWS * SLAB_COLS * slab.dtype.itemsize)),
    )(y_fm, slab)
    return out[:, :batch]


def ode_func_layered_residual(t, y, slab, *, bn_max=4096):
    """Batch-major (B, 2) forward matching the PyTorch module signature.
    Call under jit (as an ODE solver step would) so the transpose/pad
    plumbing fuses with neighbouring ops."""
    out_fm = ode_func_layered_residual_fm(t, y.T, slab, bn_max=bn_max)
    return out_fm.T.astype(y.dtype)


def ode_func_ref(t, y, p):
    """Plain-JAX f32 reference for correctness checking."""
    del t
    ye = jnp.concatenate([y, y ** 3], axis=-1)
    h_y = jnp.tanh(ye @ p["wy1"].T + p["by1"])
    h_x1 = jnp.tanh(ye @ p["wx1"].T + p["bx1"])
    h_x2 = jnp.tanh((h_y + h_x1) @ p["wx2"].T + p["bx2"])
    return (h_x2 @ p["wlx"].T + p["blx"]) + (h_y @ p["wly"].T + p["bly"])


if __name__ == "__main__":
    key = jax.random.PRNGKey(0)
    k_params, k_y = jax.random.split(key)

    params = init_params(k_params)

    B = 200                          # ragged batch -> lane padding + 2 grid steps
    y = jax.random.normal(k_y, (B, 2), jnp.float32)
    t = jnp.float32(0.0)             # unused, matches the PyTorch signature

    fwd = jax.jit(ode_func_layered_residual)
    ref = ode_func_ref(t, y, params)

    # 1) Exact-semantics check with an f32 parameter slab.
    slab_f32 = pack_params(params, dtype=jnp.float32)
    out_f32 = jax.block_until_ready(fwd(t, y, slab_f32))
    assert out_f32.shape == (B, 2)
    err_f32 = float(jnp.max(jnp.abs(out_f32 - ref)))
    assert jnp.allclose(out_f32, ref, atol=1e-5, rtol=1e-4), err_f32

    # 2) Default bf16 slab (MXU-native operands, half the weight DMA);
    #    tolerance loosened to bf16 rounding level.
    slab_bf16 = pack_params(params)
    out_bf16 = jax.block_until_ready(fwd(t, y, slab_bf16))
    err_bf16 = float(jnp.max(jnp.abs(out_bf16 - ref)))
    assert jnp.allclose(out_bf16, ref, atol=5e-2, rtol=5e-2), err_bf16

    print("KERNEL_OK")
</pallas_src>

<mosaic_0001>
module attributes {stable_mosaic.version = 11 : i64} {
  func.func @_ode_kernel(%arg0: i32, %arg1: memref<2x128xf32, #tpu.memory_space<vmem>>, %arg2: memref<400x64xf32, #tpu.memory_space<vmem>>, %arg3: memref<2x128xf32, #tpu.memory_space<vmem>>) attributes {dimension_semantics = [#tpu.dimension_semantics<parallel>], iteration_bounds = array<i64: 2>, scalar_prefetch = 0 : i64, scratch_operands = 0 : i64, tpu.core_type = #tpu.core_type<tc>, window_params = [{transform_indices = @transform_0, window_bounds = array<i64: 2, 128>}, {pipeline_mode = #tpu.pipeline_mode<synchronous>, transform_indices = @transform_1, window_bounds = array<i64: 400, 64>}, {transform_indices = @transform_2, window_bounds = array<i64: 2, 128>}]} {
    %c0 = arith.constant 0 : index
    %c0_0 = arith.constant 0 : index
    %0 = vector.load %arg1[%c0, %c0_0] : memref<2x128xf32, #tpu.memory_space<vmem>>, vector<2x128xf32>
    %1 = arith.mulf %0, %0 : vector<2x128xf32>
    %2 = arith.mulf %1, %0 : vector<2x128xf32>
    %3 = tpu.concatenate %0, %2 in 0 : vector<2x128xf32>, vector<2x128xf32> -> vector<4x128xf32>
    %c64 = arith.constant 64 : index
    %c0_1 = arith.constant 0 : index
    %4 = vector.load %arg2[%c64, %c0_1] : memref<400x64xf32, #tpu.memory_space<vmem>>, vector<112x4xf32>
    %c176 = arith.constant 176 : index
    %c0_2 = arith.constant 0 : index
    %5 = vector.load %arg2[%c176, %c0_2] : memref<400x64xf32, #tpu.memory_space<vmem>>, vector<112x1xf32>
    %c0_3 = arith.constant 0 : index
    %c0_4 = arith.constant 0 : index
    %6 = vector.load %arg2[%c0_3, %c0_4] : memref<400x64xf32, #tpu.memory_space<vmem>>, vector<56x56xf32>
    %c288 = arith.constant 288 : index
    %c0_5 = arith.constant 0 : index
    %7 = vector.load %arg2[%c288, %c0_5] : memref<400x64xf32, #tpu.memory_space<vmem>>, vector<56x1xf32>
    %c352 = arith.constant 352 : index
    %c0_6 = arith.constant 0 : index
    %8 = vector.load %arg2[%c352, %c0_6] : memref<400x64xf32, #tpu.memory_space<vmem>>, vector<2x56xf32>
    %c368 = arith.constant 368 : index
    %c0_7 = arith.constant 0 : index
    %9 = vector.load %arg2[%c368, %c0_7] : memref<400x64xf32, #tpu.memory_space<vmem>>, vector<2x56xf32>
    %c384 = arith.constant 384 : index
    %c0_8 = arith.constant 0 : index
    %10 = vector.load %arg2[%c384, %c0_8] : memref<400x64xf32, #tpu.memory_space<vmem>>, vector<2x1xf32>
    %cst = arith.constant dense<0.000000e+00> : vector<112x128xf32>
    %11 = tpu.matmul %4, %3, %cst {dimension_numbers = #tpu.dot_dimension_numbers<[1], [0], [0], [1], [0, 0, 1, 1], [], []>} : vector<112x4xf32>, vector<4x128xf32>, vector<112x128xf32> -> vector<112x128xf32>
    %12 = vector.broadcast %5 : vector<112x1xf32> to vector<112x128xf32>
    %13 = arith.addf %11, %12 : vector<112x128xf32>
    %14 = math.tanh %13 : vector<112x128xf32>
    %15 = vector.extract_strided_slice %14 {offsets = [0, 0], sizes = [56, 128], strides = [1, 1]} : vector<112x128xf32> to vector<56x128xf32>
    %16 = vector.extract_strided_slice %14 {offsets = [56, 0], sizes = [56, 128], strides = [1, 1]} : vector<112x128xf32> to vector<56x128xf32>
    %17 = arith.addf %15, %16 : vector<56x128xf32>
    %cst_9 = arith.constant dense<0.000000e+00> : vector<56x128xf32>
    %18 = tpu.matmul %6, %17, %cst_9 {dimension_numbers = #tpu.dot_dimension_numbers<[1], [0], [0], [1], [0, 0, 1, 1], [], []>} : vector<56x56xf32>, vector<56x128xf32>, vector<56x128xf32> -> vector<56x128xf32>
    %19 = vector.broadcast %7 : vector<56x1xf32> to vector<56x128xf32>
    %20 = arith.addf %18, %19 : vector<56x128xf32>
    %21 = math.tanh %20 : vector<56x128xf32>
    %cst_10 = arith.constant dense<0.000000e+00> : vector<2x128xf32>
    %22 = tpu.matmul %9, %21, %cst_10 {dimension_numbers = #tpu.dot_dimension_numbers<[1], [0], [0], [1], [0, 0, 1, 1], [], []>} : vector<2x56xf32>, vector<56x128xf32>, vector<2x128xf32> -> vector<2x128xf32>
    %cst_11 = arith.constant dense<0.000000e+00> : vector<2x128xf32>
    %23 = tpu.matmul %8, %15, %cst_11 {dimension_numbers = #tpu.dot_dimension_numbers<[1], [0], [0], [1], [0, 0, 1, 1], [], []>} : vector<2x56xf32>, vector<56x128xf32>, vector<2x128xf32> -> vector<2x128xf32>
    %24 = arith.addf %22, %23 : vector<2x128xf32>
    %25 = vector.broadcast %10 : vector<2x1xf32> to vector<2x128xf32>
    %26 = arith.addf %24, %25 : vector<2x128xf32>
    %c0_12 = arith.constant 0 : index
    %c0_13 = arith.constant 0 : index
    %27 = vector.load %arg3[%c0_12, %c0_13] : memref<2x128xf32, #tpu.memory_space<vmem>>, vector<2x128xf32>
    tpu.vector_store %arg3[%c0_12, %c0_13], %26 {strides = array<i32>} : memref<2x128xf32, #tpu.memory_space<vmem>>, vector<2x128xf32>,
    return
  }
  func.func @transform_0(%arg0: i32) -> (i32, i32) {
    %c0_i32 = arith.constant 0 : i32
    %c0_i32_0 = arith.constant 0 : i32
    return %c0_i32, %arg0 : i32, i32
  }
  func.func @transform_1(%arg0: i32) -> (i32, i32) {
    %c0_i32 = arith.constant 0 : i32
    %c0_i32_0 = arith.constant 0 : i32
    %c0_i32_1 = arith.constant 0 : i32
    return %c0_i32, %c0_i32_0 : i32, i32
  }
  func.func @transform_2(%arg0: i32) -> (i32, i32) {
    %c0_i32 = arith.constant 0 : i32
    %c0_i32_0 = arith.constant 0 : i32
    return %c0_i32, %arg0 : i32, i32
  }
}

</mosaic_0001>

<llo_original>
// kernel: ode_func_layered_residual.1
$region0: #{ode_func_layered_residual.1}
  #allocation0 [shape = 'u32[]', space=smem, size = 0x4, offset = 0x4, fixed_abs, tag = 'smem constant byte address 0x4 - core index']
  #allocation1 [shape = 'u32[72,128]{1,0:T(1,128)}', space=vmem, size = 0x9000, scoped, tag = 'internal scratch']
  %s0 = inlined_call_operand.vmem [shape: f32[2,256], index: 0, kind: input, shape index: {}]
  %s1 = inlined_call_operand.vmem [shape: f32[400,64], index: 1, kind: input, shape index: {}]
  %s2 = inlined_call_operand.vmem [shape: f32[2,256], index: 2, kind: output, shape index: {}]
  %s3 = sld [smem:[#allocation0]]
  $region41: #{ode_func_layered_residual.1} parent=0
    _
  %s5 = ssub.s32 1, %s3
  %s6 = scalar_select 0, %s5, %s3
  loop: start=0, step=1, limit=4
  $region2: #{ode_func_layered_residual.1} parent=0 // loop_pre_header
    _
  $region3: #{ode_func_layered_residual.1} parent=0 // loop_header
    %s8 = sphi 0, %s12
    %p9 = scmp.ge.s32.totalorder %s8, 4
    %s18 = sphi 0, %s20
    %s21 = sphi 0, %s18
    %s22 = sphi 0, %s21
    %s38 = sphi 0, %s22
    %s42 = sphi 0, %s42
    %s44 = sphi 0, %s42
    %s45 = sphi 0, %s44
    %s59 = sphi 0, %s45
    %s65 = sphi 0, %s67
    %s68 = sphi 0, %s65
    %s69 = sphi 0, %s68
    %s85 = sphi 0, %s69
  $region4: #{ode_func_layered_residual.1} parent=0 // loop_header_branch
    %11 = sbr.rel (%p9) target = $region8
  $region5: #{ode_func_layered_residual.1} parent=0 // loop_body
    %s13 = ssub.s32 %s8, 1
    %s14 = ssub.s32 %s8, 2
    %s15 = sadd.s32 %s8, 1
    %s16 = ssub.s32 %s8, %s15
    %p17 = scmp.eq.s32.totalorder %s16, 0
    %s19 = sadd.s32 %s18, 1
    %s20 = scalar_select %p17, %s18, %s19
    %p23 = pneg %p17
    %p24 = scmp.eq.s32.totalorder %s8, 1
    %p25 = por %p23, %p24
    %p26 = scmp.ne.s32.totalorder %s18, %s21
    %p27 = scmp.eq.s32.totalorder %s8, 0
    %p28 = por %p26, %p27
    %p29 = scmp.ne.s32.totalorder %s18, %s21
    %p30 = scmp.eq.s32.totalorder %s13, 1
    %p31 = por %p29, %p30
    %p32 = scmp.ne.s32.totalorder %s21, %s22
    %p33 = scmp.eq.s32.totalorder %s13, 0
    %p34 = por %p32, %p33
    %p35 = scmp.ne.s32.totalorder %s21, %s22
    %p36 = scmp.eq.s32.totalorder %s14, 1
    %p37 = por %p35, %p36
    %p39 = scmp.ne.s32.totalorder %s22, %s38
    %p40 = scmp.eq.s32.totalorder %s14, 0
    %p41 = por %p39, %p40
    %s43 = sadd.s32 %s42, 1
    %p46 = scmp.eq.s32.totalorder %s8, 1
    %p47 = scmp.ne.s32.totalorder %s42, %s44
    %p48 = scmp.eq.s32.totalorder %s8, 0
    %p49 = por %p47, %p48
    %p50 = scmp.ne.s32.totalorder %s42, %s44
    %p51 = scmp.eq.s32.totalorder %s13, 1
    %p52 = por %p50, %p51
    %p53 = scmp.ne.s32.totalorder %s44, %s45
    %p54 = scmp.eq.s32.totalorder %s13, 0
    %p55 = por %p53, %p54
    %p56 = scmp.ne.s32.totalorder %s44, %s45
    %p57 = scmp.eq.s32.totalorder %s14, 1
    %p58 = por %p56, %p57
    %p60 = scmp.ne.s32.totalorder %s45, %s59
    %p61 = scmp.eq.s32.totalorder %s14, 0
    %p62 = por %p60, %p61
    %s63 = ssub.s32 %s8, %s15
    %p64 = scmp.eq.s32.totalorder %s63, 0
    %s66 = sadd.s32 %s65, 1
    %s67 = scalar_select %p64, %s65, %s66
    %p70 = pneg %p64
    %p71 = scmp.eq.s32.totalorder %s8, 1
    %p72 = por %p70, %p71
    %p73 = scmp.ne.s32.totalorder %s65, %s68
    %p74 = scmp.eq.s32.totalorder %s8, 0
    %p75 = por %p73, %p74
    %p76 = scmp.ne.s32.totalorder %s65, %s68
    %p77 = scmp.eq.s32.totalorder %s13, 1
    %p78 = por %p76, %p77
    %p79 = scmp.ne.s32.totalorder %s68, %s69
    %p80 = scmp.eq.s32.totalorder %s13, 0
    %p81 = por %p79, %p80
    %p82 = scmp.ne.s32.totalorder %s68, %s69
    %p83 = scmp.eq.s32.totalorder %s14, 1
    %p84 = por %p82, %p83
    %p86 = scmp.ne.s32.totalorder %s69, %s85
    %p87 = scmp.eq.s32.totalorder %s14, 0
    %p88 = por %p86, %p87
    %p89 = scmp.le.s32.totalorder 1, %s8
    %p90 = scmp.lt.s32.totalorder %s8, 3
    %p91 = pnand %p89, %p90
    %p92 = pneg %p91
    // Predicated region
    $region9: #{ode_func_layered_residual.1} parent=5 // pred_check
      _
    $region10: #{ode_func_layered_residual.1} parent=5 // pred_check_branch
      %94 = sbr.rel (%p91) target = $region12
    $region11: #{ode_func_layered_residual.1} parent=5 // pred_region
      %s95 = ssub.s32 %s8, 1
      // Predicated region
      $region13: #{ode_func_layered_residual.1} parent=11 // pred_check
        %p96 = pneg %p55
      $region14: #{ode_func_layered_residual.1} parent=11 // pred_check_branch
        %98 = sbr.rel (%p96) target = $region16
      $region15: #{ode_func_layered_residual.1} parent=11 // pred_region
        _
      $region16: #{ode_func_layered_residual.1} parent=11 // pred_fallthru
        _
    $region12: #{ode_func_layered_residual.1} parent=5 // pred_fallthru
      _
    %p99 = scmp.lt.s32.totalorder %s8, 2
    // Predicated region
    $region17: #{ode_func_layered_residual.1} parent=5 // pred_check
      %p100 = pneg %p99
    $region18: #{ode_func_layered_residual.1} parent=5 // pred_check_branch
      %102 = sbr.rel (%p100) target = $region20
    $region19: #{ode_func_layered_residual.1} parent=5 // pred_region
      // Predicated region
      $region21: #{ode_func_layered_residual.1} parent=19 // pred_check
        %p103 = pneg %p28
      $region22: #{ode_func_layered_residual.1} parent=19 // pred_check_branch
        %105 = sbr.rel (%p103) target = $region24
      $region23: #{ode_func_layered_residual.1} parent=19 // pred_region
        %p106 = scmp.lt.s32.totalorder %s8, 1
        %s107 = scalar_select %p106, %s8, 1
        %s108 = smul.addr %s107, 2
        %s109 = scalar_lea.vmem %s0, %s108
      $region24: #{ode_func_layered_residual.1} parent=19 // pred_fallthru
        _
    $region20: #{ode_func_layered_residual.1} parent=5 // pred_fallthru
      _
    %p110 = scmp.le.s32.totalorder 1, %s8
    %p111 = scmp.lt.s32.totalorder %s8, 3
    %p112 = pnand %p110, %p111
    %p113 = pneg %p112
    // Predicated region
    $region25: #{ode_func_layered_residual.1} parent=5 // pred_check
      _
    $region26: #{ode_func_layered_residual.1} parent=5 // pred_check_branch
      %115 = sbr.rel (%p112) target = $region28
    $region27: #{ode_func_layered_residual.1} parent=5 // pred_region
      %s116 = ssub.s32 %s8, 1
      %p117 = scmp.lt.s32.totalorder %s13, 1
      %s118 = scalar_select %p117, %s13, 1
      %s119 = smul.addr %s118, 2
      %s120 = scalar_lea.vmem %s0, %s119
      %p121 = pneg %p34
      %p122 = pneg %p31
      %p123 = pneg %p55
      %p124 = pneg %p52
      %p125 = pneg %p81
      %p126 = pneg %p78
      %p127 = scmp.lt.s32.totalorder %s13, 1
      %s128 = scalar_select %p127, %s13, 1
      %s129 = smul.addr %s128, 2
      %s130 = scalar_lea.vmem %s2, %s129
      %p131 = scmp.lt.s32.totalorder %s13, 1
      %s132 = scalar_select %p131, %s13, 1
      %s133 = smul.addr %s132, 2
      %s134 = scalar_lea.vmem %s0, %s133
      %p135 = scmp.lt.s32.totalorder %s13, 1
      %s136 = scalar_select %p135, %s13, 1
      %s137 = smul.addr %s136, 2
      %s138 = scalar_lea.vmem %s2, %s137
      %v139 = vld [vmem:[%s134] sm:$0x3]
      %v140 = vmul.f32 %v139, %v139
      %v141 = vmul.f32 %v140, %v139
      %v143 = vrot.slane %v141, 6
      %vm145 = vcmask 1041408
      %v146 = vsel %vm145, %v139, %v143
      %v147 = vld [vmem:[%s1 + $0x40] sm:$0xff]
      %v148 = vld [vmem:[%s1 + $0x48] sm:$0xff]
      %v149 = vld [vmem:[%s1 + $0x50] sm:$0xff]
      %v150 = vld [vmem:[%s1 + $0x58] sm:$0xff]
      %v151 = vld [vmem:[%s1 + $0x60] sm:$0xff]
      %v152 = vld [vmem:[%s1 + $0x68] sm:$0xff]
      %v153 = vld [vmem:[%s1 + $0x70] sm:$0xff]
      %v154 = vld [vmem:[%s1 + $0x78] sm:$0xff]
      %v155 = vld [vmem:[%s1 + $0x80] sm:$0xff]
      %v156 = vld [vmem:[%s1 + $0x88] sm:$0xff]
      %v157 = vld [vmem:[%s1 + $0x90] sm:$0xff]
      %v158 = vld [vmem:[%s1 + $0x98] sm:$0xff]
      %v159 = vld [vmem:[%s1 + $0xa0] sm:$0xff]
      %v160 = vld [vmem:[%s1 + $0xa8] sm:$0xff]
      %v161 = vld [vmem:[%s1 + $0xb0] sm:$0xff]
      %v162 = vld [vmem:[%s1 + $0xb8] sm:$0xff]
      %v163 = vld [vmem:[%s1 + $0xc0] sm:$0xff]
      %v164 = vld [vmem:[%s1 + $0xc8] sm:$0xff]
      %v165 = vld [vmem:[%s1 + $0xd0] sm:$0xff]
      %v166 = vld [vmem:[%s1 + $0xd8] sm:$0xff]
      %v167 = vld [vmem:[%s1 + $0xe0] sm:$0xff]
      %v168 = vld [vmem:[%s1 + $0xe8] sm:$0xff]
      %v169 = vld [vmem:[%s1 + $0xf0] sm:$0xff]
      %v170 = vld [vmem:[%s1 + $0xf8] sm:$0xff]
      %v171 = vld [vmem:[%s1 + $0x100] sm:$0xff]
      %v172 = vld [vmem:[%s1 + $0x108] sm:$0xff]
      %v173 = vld [vmem:[%s1 + $0x110] sm:$0xff]
      %v174 = vld [vmem:[%s1 + $0x118] sm:$0xff]
      %v175 = vld [vmem:[%s1] sm:$0xff]
      %v176 = vld [vmem:[%s1 + $0x8] sm:$0xff]
      %v177 = vld [vmem:[%s1 + $0x10] sm:$0xff]
      %v178 = vld [vmem:[%s1 + $0x18] sm:$0xff]
      %v179 = vld [vmem:[%s1 + $0x20] sm:$0xff]
      %v180 = vld [vmem:[%s1 + $0x28] sm:$0xff]
      %v181 = vld [vmem:[%s1 + $0x30] sm:$0xff]
      %v182 = vld [vmem:[%s1 + $0x120] sm:$0xff]
      %v183 = vld [vmem:[%s1 + $0x128] sm:$0xff]
      %v184 = vld [vmem:[%s1 + $0x130] sm:$0xff]
      %v185 = vld [vmem:[%s1 + $0x138] sm:$0xff]
      %v186 = vld [vmem:[%s1 + $0x140] sm:$0xff]
      %v187 = vld [vmem:[%s1 + $0x148] sm:$0xff]
      %v188 = vld [vmem:[%s1 + $0x150] sm:$0xff]
      %v189 = vld [vmem:[%s1 + $0x160] sm:$0x3]
      %v190 = vld [vmem:[%s1 + $0x170] sm:$0x3]
      %v191 = vld [vmem:[%s1 + $0x180] sm:$0x3]
      %193 = vset.pattern.permute.xlu0 0
      %194 = vperm.xlu0 %193, %v161
      %v195 = vpop.permute.xlu0 %194
      %198 = vset.pattern.permute.xlu0 0
      %199 = vperm.xlu0 %198, %v162
      %v200 = vpop.permute.xlu0 %199
      %203 = vset.pattern.permute.xlu0 0
      %204 = vperm.xlu0 %203, %v163
      %v205 = vpop.permute.xlu0 %204
      %208 = vset.pattern.permute.xlu0 0
      %209 = vperm.xlu0 %208, %v164
      %v210 = vpop.permute.xlu0 %209
      %213 = vset.pattern.permute.xlu0 0
      %214 = vperm.xlu0 %213, %v165
      %v215 = vpop.permute.xlu0 %214
      %218 = vset.pattern.permute.xlu0 0
      %219 = vperm.xlu0 %218, %v166
      %v220 = vpop.permute.xlu0 %219
      %223 = vset.pattern.permute.xlu0 0
      %224 = vperm.xlu0 %223, %v167
      %v225 = vpop.permute.xlu0 %224
      %228 = vset.pattern.permute.xlu0 0
      %229 = vperm.xlu0 %228, %v168
      %v230 = vpop.permute.xlu0 %229
      %233 = vset.pattern.permute.xlu0 0
      %234 = vperm.xlu0 %233, %v169
      %v235 = vpop.permute.xlu0 %234
      %238 = vset.pattern.permute.xlu0 0
      %239 = vperm.xlu0 %238, %v170
      %v240 = vpop.permute.xlu0 %239
      %243 = vset.pattern.permute.xlu0 0
      %244 = vperm.xlu0 %243, %v171
      %v245 = vpop.permute.xlu0 %244
      %248 = vset.pattern.permute.xlu0 0
      %249 = vperm.xlu0 %248, %v172
      %v250 = vpop.permute.xlu0 %249
      %253 = vset.pattern.permute.xlu0 0
      %254 = vperm.xlu0 %253, %v173
      %v255 = vpop.permute.xlu0 %254
      %258 = vset.pattern.permute.xlu0 0
      %259 = vperm.xlu0 %258, %v174
      %v260 = vpop.permute.xlu0 %259
      %vm262 = vcmask 31744
      %v264 = vsel %vm262, %v147, 0
      %v267 = vsel %vm262, %v148, 0
      %v270 = vsel %vm262, %v149, 0
      %v273 = vsel %vm262, %v150, 0
      %v276 = vsel %vm262, %v151, 0
      %v279 = vsel %vm262, %v152, 0
      %v282 = vsel %vm262, %v153, 0
      %v285 = vsel %vm262, %v154, 0
      %v288 = vsel %vm262, %v155, 0
      %v291 = vsel %vm262, %v156, 0
      %v294 = vsel %vm262, %v157, 0
      %v297 = vsel %vm262, %v158, 0
      %v300 = vsel %vm262, %v159, 0
      %v303 = vsel %vm262, %v160, 0
      %vm305 = vcmask 1043456
      %v307 = vsel %vm305, %v146, 0
      %309 = vmatpush.msra.mxu0 0.0
      %310 = vmatpush.msra.mxu0 0.0
      %311 = vmatpush.msra.mxu0 0.0
      %312 = vmatpush.msra.mxu0 0.0
      %313 = vmatpush.msra.mxu0 0.0
      %314 = vmatpush.msra.mxu0 0.0
      %315 = vmatpush.msra.mxu0 0.0
      %316 = vmatpush.msra.mxu0 0.0
      %317 = vmatpush.msra.mxu0 0.0
      %318 = vmatpush.msra.mxu0 0.0
      %319 = vmatpush.msra.mxu0 0.0
      %320 = vmatpush.msra.mxu0 0.0
      %321 = vmatpush.msra.mxu0 0.0
      %322 = vmatpush.msra.mxu0 0.0
      %323 = vmatpush.msra.mxu0 0.0
      %324 = vmatpush.msra.mxu0 %v307
      %325 = vmatmul.f32.gmra.mxu0 %v264
      %v326 = vpop.f32.mrf.mxu0
      %v327 = vadd.f32 %v195, %v326
      %328 = vmatmul.f32.gmra.mxu0 %v267
      %v329 = vpop.f32.mrf.mxu0
      %v330 = vadd.f32 %v200, %v329
      %331 = vmatmul.f32.gmra.mxu0 %v270
      %v332 = vpop.f32.mrf.mxu0
      %v333 = vadd.f32 %v205, %v332
      %334 = vmatmul.f32.gmra.mxu0 %v273
      %v335 = vpop.f32.mrf.mxu0
      %v336 = vadd.f32 %v210, %v335
      %337 = vmatmul.f32.gmra.mxu0 %v276
      %v338 = vpop.f32.mrf.mxu0
      %v339 = vadd.f32 %v215, %v338
      %340 = vmatmul.f32.gmra.mxu0 %v279
      %v341 = vpop.f32.mrf.mxu0
      %v342 = vadd.f32 %v220, %v341
      %343 = vmatmul.f32.gmra.mxu0 %v282
      %v344 = vpop.f32.mrf.mxu0
      %v345 = vadd.f32 %v225, %v344
      %346 = vmatmul.f32.gmra.mxu0 %v285
      %v347 = vpop.f32.mrf.mxu0
      %v348 = vadd.f32 %v230, %v347
      %349 = vmatmul.f32.gmra.mxu0 %v288
      %v350 = vpop.f32.mrf.mxu0
      %v351 = vadd.f32 %v235, %v350
      %352 = vmatmul.f32.gmra.mxu0 %v291
      %v353 = vpop.f32.mrf.mxu0
      %v354 = vadd.f32 %v240, %v353
      %355 = vmatmul.f32.gmra.mxu0 %v294
      %v356 = vpop.f32.mrf.mxu0
      %v357 = vadd.f32 %v245, %v356
      %358 = vmatmul.f32.gmra.mxu0 %v297
      %v359 = vpop.f32.mrf.mxu0
      %v360 = vadd.f32 %v250, %v359
      %361 = vmatmul.f32.gmra.mxu0 %v300
      %v362 = vpop.f32.mrf.mxu0
      %v363 = vadd.f32 %v255, %v362
      %364 = vmatmul.f32.gmra.mxu0 %v303
      %v365 = vpop.f32.mrf.mxu0
      %v366 = vadd.f32 %v260, %v365
      %367 = vdwg.mxu0
      %v368 = vtanh.pop %v327
      %v369 = vtanh.pop %v330
      %v370 = vtanh.pop %v333
      %v371 = vtanh.pop %v336
      %v372 = vtanh.pop %v339
      %v373 = vtanh.pop %v342
      %v374 = vtanh.pop %v345
      %v375 = vtanh.pop %v348
      %v376 = vtanh.pop %v351
      %v377 = vtanh.pop %v354
      %v378 = vtanh.pop %v357
      %v379 = vtanh.pop %v360
      %v380 = vtanh.pop %v363
      %v381 = vtanh.pop %v366
      %v382 = vadd.f32 %v368, %v375
      %v383 = vadd.f32 %v369, %v376
      %v384 = vadd.f32 %v370, %v377
      %v385 = vadd.f32 %v371, %v378
      %v386 = vadd.f32 %v372, %v379
      %v387 = vadd.f32 %v373, %v380
      %v388 = vadd.f32 %v374, %v381
      %390 = vset.pattern.permute.xlu0 0
      %391 = vperm.xlu0 %390, %v182
      %v392 = vpop.permute.xlu0 %391
      %395 = vset.pattern.permute.xlu0 0
      %396 = vperm.xlu0 %395, %v183
      %v397 = vpop.permute.xlu0 %396
      %400 = vset.pattern.permute.xlu0 0
      %401 = vperm.xlu0 %400, %v184
      %v402 = vpop.permute.xlu0 %401
      %405 = vset.pattern.permute.xlu0 0
      %406 = vperm.xlu0 %405, %v185
      %v407 = vpop.permute.xlu0 %406
      %410 = vset.pattern.permute.xlu0 0
      %411 = vperm.xlu0 %410, %v186
      %v412 = vpop.permute.xlu0 %411
      %415 = vset.pattern.permute.xlu0 0
      %416 = vperm.xlu0 %415, %v187
      %v417 = vpop.permute.xlu0 %416
      %420 = vset.pattern.permute.xlu0 0
      %421 = vperm.xlu0 %420, %v188
      %v422 = vpop.permute.xlu0 %421
      %vm424 = vcmask 457728
      %v426 = vsel %vm424, %v175, 0
      %v429 = vsel %vm424, %v176, 0
      %v432 = vsel %vm424, %v177, 0
      %v435 = vsel %vm424, %v178, 0
      %v438 = vsel %vm424, %v179, 0
      %v441 = vsel %vm424, %v180, 0
      %v444 = vsel %vm424, %v181, 0
      %446 = vmatpush.msra.mxu0 0.0
      %447 = vmatpush.msra.mxu0 0.0
      %448 = vmatpush.msra.mxu0 0.0
      %449 = vmatpush.msra.mxu0 0.0
      %450 = vmatpush.msra.mxu0 0.0
      %451 = vmatpush.msra.mxu0 0.0
      %452 = vmatpush.msra.mxu0 0.0
      %453 = vmatpush.msra.mxu0 0.0
      %454 = vmatpush.msra.mxu0 0.0
      %455 = vmatpush.msra.mxu0 %v388
      %456 = vmatpush.msra.mxu0 %v387
      %457 = vmatpush.msra.mxu0 %v386
      %458 = vmatpush.msra.mxu0 %v385
      %459 = vmatpush.msra.mxu0 %v384
      %460 = vmatpush.msra.mxu0 %v383
      %461 = vmatpush.msra.mxu0 %v382
      %462 = vmatmul.f32.gmra.mxu0 %v426
      %v463 = vpop.f32.mrf.mxu0
      %v464 = vadd.f32 %v392, %v463
      %465 = vmatmul.f32.gmra.mxu0 %v429
      %v466 = vpop.f32.mrf.mxu0
      %v467 = vadd.f32 %v397, %v466
      %468 = vmatmul.f32.gmra.mxu0 %v432
      %v469 = vpop.f32.mrf.mxu0
      %v470 = vadd.f32 %v402, %v469
      %471 = vmatmul.f32.gmra.mxu0 %v435
      %v472 = vpop.f32.mrf.mxu0
      %v473 = vadd.f32 %v407, %v472
      %474 = vmatmul.f32.gmra.mxu0 %v438
      %v475 = vpop.f32.mrf.mxu0
      %v476 = vadd.f32 %v412, %v475
      %477 = vmatmul.f32.gmra.mxu0 %v441
      %v478 = vpop.f32.mrf.mxu0
      %v479 = vadd.f32 %v417, %v478
      %480 = vmatmul.f32.gmra.mxu0 %v444
      %v481 = vpop.f32.mrf.mxu0
      %v482 = vadd.f32 %v422, %v481
      %483 = vdwg.mxu0
      %v484 = vtanh.pop %v464
      %v485 = vtanh.pop %v467
      %v486 = vtanh.pop %v470
      %v487 = vtanh.pop %v473
      %v488 = vtanh.pop %v476
      %v489 = vtanh.pop %v479
      %v490 = vtanh.pop %v482
      %v492 = vsel %vm424, %v189, 0
      %494 = vmatpush.msra.mxu0 0.0
      %495 = vmatpush.msra.mxu0 0.0
      %496 = vmatpush.msra.mxu0 0.0
      %497 = vmatpush.msra.mxu0 0.0
      %498 = vmatpush.msra.mxu0 0.0
      %499 = vmatpush.msra.mxu0 0.0
      %500 = vmatpush.msra.mxu0 0.0
      %501 = vmatpush.msra.mxu0 0.0
      %502 = vmatpush.msra.mxu0 0.0
      %503 = vmatpush.msra.mxu0 %v374
      %504 = vmatpush.msra.mxu0 %v373
      %505 = vmatpush.msra.mxu0 %v372
      %506 = vmatpush.msra.mxu0 %v371
      %507 = vmatpush.msra.mxu0 %v370
      %508 = vmatpush.msra.mxu0 %v369
      %509 = vmatpush.msra.mxu0 %v368
      %510 = vmatmul.f32.gmra.mxu0 %v492
      %v511 = vpop.f32.mrf.mxu0
      %v512 = vadd.f32 0.0, %v511
      %513 = vdwg.mxu0
      %v515 = vsel %vm424, %v190, 0
      %517 = vmatpush.msra.mxu0 0.0
      %518 = vmatpush.msra.mxu0 0.0
      %519 = vmatpush.msra.mxu0 0.0
      %520 = vmatpush.msra.mxu0 0.0
      %521 = vmatpush.msra.mxu0 0.0
      %522 = vmatpush.msra.mxu0 0.0
      %523 = vmatpush.msra.mxu0 0.0
      %524 = vmatpush.msra.mxu0 0.0
      %525 = vmatpush.msra.mxu0 0.0
      %526 = vmatpush.msra.mxu0 %v490
      %527 = vmatpush.msra.mxu0 %v489
      %528 = vmatpush.msra.mxu0 %v488
      %529 = vmatpush.msra.mxu0 %v487
      %530 = vmatpush.msra.mxu0 %v486
      %531 = vmatpush.msra.mxu0 %v485
      %532 = vmatpush.msra.mxu0 %v484
      %533 = vmatmul.f32.gmra.mxu0 %v515
      %v534 = vpop.f32.mrf.mxu0
      %v535 = vadd.f32 %v512, %v534
      %536 = vdwg.mxu0
      %538 = vset.pattern.permute.xlu0 0
      %539 = vperm.xlu0 %538, %v191
      %v540 = vpop.permute.xlu0 %539
      %v542 = vadd.f32 %v535, %v540
      %543 = vst [vmem:[%s138] sm:$0x3] %v542
      %p544 = scmp.lt.s32.totalorder %s13, 1
      %s545 = scalar_select %p544, %s13, 1
      %s546 = smul.addr %s545, 2
      %s547 = scalar_lea.vmem %s2, %s546
      // Predicated region
      $region29: #{ode_func_layered_residual.1} parent=27 // pred_check
        %p548 = pneg %p78
      $region30: #{ode_func_layered_residual.1} parent=27 // pred_check_branch
        %550 = sbr.rel (%p548) target = $region32
      $region31: #{ode_func_layered_residual.1} parent=27 // pred_region
        _
      $region32: #{ode_func_layered_residual.1} parent=27 // pred_fallthru
        _
    $region28: #{ode_func_layered_residual.1} parent=5 // pred_fallthru
      _
    %p551 = scmp.le.s32.totalorder 2, %s8
    // Predicated region
    $region33: #{ode_func_layered_residual.1} parent=5 // pred_check
      %p552 = pneg %p551
    $region34: #{ode_func_layered_residual.1} parent=5 // pred_check_branch
      %554 = sbr.rel (%p552) target = $region36
    $region35: #{ode_func_layered_residual.1} parent=5 // pred_region
      %s555 = ssub.s32 %s8, 2
      // Predicated region
      $region37: #{ode_func_layered_residual.1} parent=35 // pred_check
        %p556 = pneg %p84
      $region38: #{ode_func_layered_residual.1} parent=35 // pred_check_branch
        %558 = sbr.rel (%p556) target = $region40
      $region39: #{ode_func_layered_residual.1} parent=35 // pred_region
        %p559 = scmp.lt.s32.totalorder %s14, 1
        %s560 = scalar_select %p559, %s14, 1
        %s561 = smul.addr %s560, 2
        %s562 = scalar_lea.vmem %s2, %s561
      $region40: #{ode_func_layered_residual.1} parent=35 // pred_fallthru
        _
    $region36: #{ode_func_layered_residual.1} parent=5 // pred_fallthru
      _
  $region6: #{ode_func_layered_residual.1} parent=0 // loop_footer
    %s12 = sadd.s32 1, %s8
  $region7: #{ode_func_layered_residual.1} parent=0 // loop_footer_branch
    %7 = sbr.rel target = $region3
  $region8: #{ode_func_layered_residual.1} parent=0 // loop_exit
    _

</llo_original>
